<compile_context>
chip_gen: v6e
topology: v6e:2x2x1
jax: 0.10.0
libtpu: 0.0.40
codegen_flags: <defaults>
</compile_context>

<pallas_src>
import math
import functools

import jax
import jax.numpy as jnp
from jax.experimental import pallas as pl
from jax.experimental.pallas import tpu as pltpu


# ---------------------------------------------------------------------------
# Sinusoidal PE table (identical to the PyTorch __init__).
# ---------------------------------------------------------------------------
def _make_pe_table(max_len: int, d_model: int) -> jnp.ndarray:
    position = jnp.arange(0, max_len, dtype=jnp.float32)[:, None]           # (L, 1)
    div_term = jnp.exp(
        jnp.arange(0, d_model, 2, dtype=jnp.float32)
        * (-(math.log(10000.0) / d_model))
    )                                                                        # (D/2,)
    ang = position * div_term                                                # (L, D/2)
    # interleave sin into even cols, cos into odd cols
    pe = jnp.stack([jnp.sin(ang), jnp.cos(ang)], axis=-1).reshape(max_len, d_model)
    return pe


# ---------------------------------------------------------------------------
# Tiling policy
# ---------------------------------------------------------------------------
_TILE_BUDGET_BYTES = 8 << 20        # per x tile (y tile is the same size)
_COL_CAP_ELEMS = 1 << 20            # caps the f32 PE row tile at 4 MiB
_ROW_TARGET = 256                   # target rows per tile in the (B, T*D) layout
_VMEM_LIMIT_BYTES = 48 << 20        # fits v7x's 64 MiB physical VMEM with headroom
_PE_RESIDENT_CAP_BYTES = 4 << 20    # max resident PE strip (per buffer) for path A


def _round_down(x: int, m: int) -> int:
    return (x // m) * m


def _sublane_base(dtype) -> int:
    itemsize = jnp.dtype(dtype).itemsize
    return max(8, 32 // max(itemsize, 1))   # 8 f32 / 16 bf16 / 32 int8


# ---------------------------------------------------------------------------
# Kernels
# ---------------------------------------------------------------------------
def _pe_row_kernel(x_ref, pe_ref, y_ref, *, xscale: float):
    # x_ref: (rb, cb) tile of the lane-dense (B, T*D) flatten.
    # pe_ref: (1, cb) matching f32 PE slice, broadcast over rows.
    x = x_ref[...].astype(jnp.float32)
    pe = pe_ref[...].astype(jnp.float32)
    y_ref[...] = (x * xscale + pe).astype(y_ref.dtype)


def _pe_resident_kernel(x_ref, pe_ref, y_ref, *, xscale: float,
                        rt: int, n_t: int, sub: int):
    # x_ref: (rt, cd) tile of the (B*T, D) flatten.
    # pe_ref: (T, cd) f32 PE column strip, resident in VMEM across inner steps.
    i = pl.program_id(1)                       # row-block index (inner grid axis)
    t0 = (i % n_t) * rt                        # time offset of this row block
    t0 = pl.multiple_of(t0, sub)
    pe = pe_ref[pl.ds(t0, rt), :].astype(jnp.float32)
    x = x_ref[...].astype(jnp.float32)
    y_ref[...] = (x * xscale + pe).astype(y_ref.dtype)


# ---------------------------------------------------------------------------
# Wrapper
# ---------------------------------------------------------------------------
def positional_encoding_forward(x: jnp.ndarray,
                                pe_table: jnp.ndarray,
                                offset: int = 0):
    """x: (B, T, D); pe_table: (max_len, D) float32. Returns (y, pos_emb)."""
    B, T, D = x.shape
    max_len, d_model = pe_table.shape
    assert D == d_model
    assert offset + T < max_len            # same assertion as the PyTorch module
    xscale = math.sqrt(float(D))
    itemsize = jnp.dtype(x.dtype).itemsize
    sub = _sublane_base(x.dtype)

    # PE slice computed (cheaply) in the wrapper; it IS the pos_emb output.
    pe_slice = jax.lax.dynamic_slice(pe_table, (offset, 0), (T, D))   # f32 (T, D)
    pos_emb = pe_slice[None]                                          # (1, T, D) f32

    compiler_params = pltpu.CompilerParams(
        dimension_semantics=("parallel", "parallel"),
        vmem_limit_bytes=_VMEM_LIMIT_BYTES,
    )

    # Path A (small batch): flatten to (B*T, D) for full sublane packing and
    # unmasked stores; keep the PE strip resident in VMEM, slice rows in-kernel.
    use_resident = (
        B < sub
        and D % 128 == 0
        and T % sub == 0
        and T * D * 4 <= _PE_RESIDENT_CAP_BYTES
    )

    if use_resident:
        rows = B * T
        # rt: largest multiple of `sub` that divides T, bounded by 512.
        rt = sub
        cand = _round_down(min(T, 512), sub)
        while cand >= sub:
            if T % cand == 0 and cand * 128 * itemsize <= _TILE_BUDGET_BYTES:
                rt = cand
                break
            cand -= sub
        n_t = T // rt

        col_target = max(128, _TILE_BUDGET_BYTES // (rt * itemsize))
        col_target = min(col_target, _COL_CAP_ELEMS)
        if D <= col_target:
            cd = D                                  # full dim — always legal
        else:
            cd = _round_down(col_target, 128)       # multiple of 128; ragged edge masked

        grid = (pl.cdiv(D, cd), rows // rt)         # cols OUTER → PE strip resident

        kernel = functools.partial(_pe_resident_kernel, xscale=xscale,
                                   rt=rt, n_t=n_t, sub=sub)
        y2d = pl.pallas_call(
            kernel,
            out_shape=jax.ShapeDtypeStruct((rows, D), x.dtype),
            grid_spec=pltpu.PrefetchScalarGridSpec(
                num_scalar_prefetch=0,
                grid=grid,
                in_specs=[
                    pl.BlockSpec((rt, cd), lambda j, i: (i, j)),    # x
                    pl.BlockSpec((T, cd), lambda j, i: (0, j)),     # PE (resident)
                ],
                out_specs=pl.BlockSpec((rt, cd), lambda j, i: (i, j)),
            ),
            compiler_params=compiler_params,
        )(x.reshape(rows, D), pe_slice)
        y = y2d.reshape(B, T, D)
    else:
        # Path B: lane-dense (B, T*D) flatten; PE row shared across batch rows.
        TD = T * D
        if B <= _ROW_TARGET:
            rb = B                                  # full dim — always legal
        else:
            rb = _round_down(_ROW_TARGET, sub)      # multiple of sub; ragged edge masked

        col_target = max(128, _TILE_BUDGET_BYTES // (max(rb, 1) * itemsize))
        col_target = min(col_target, _COL_CAP_ELEMS)
        if TD <= col_target:
            cb = TD                                 # full dim — always legal
        else:
            cb = _round_down(col_target, 128)       # multiple of 128; ragged edge masked

        grid = (pl.cdiv(TD, cb), pl.cdiv(B, rb))    # cols OUTER → PE row tile resident

        kernel = functools.partial(_pe_row_kernel, xscale=xscale)
        y2d = pl.pallas_call(
            kernel,
            out_shape=jax.ShapeDtypeStruct((B, TD), x.dtype),
            grid_spec=pltpu.PrefetchScalarGridSpec(
                num_scalar_prefetch=0,
                grid=grid,
                in_specs=[
                    pl.BlockSpec((rb, cb), lambda j, i: (i, j)),    # x
                    pl.BlockSpec((1, cb), lambda j, i: (0, j)),     # PE row (f32)
                ],
                out_specs=pl.BlockSpec((rb, cb), lambda j, i: (i, j)),
            ),
            compiler_params=compiler_params,
        )(x.reshape(B, TD), pe_slice.reshape(1, TD))
        y = y2d.reshape(B, T, D)

    # Dropout in eval mode == identity.
    # TODO(synk): training-mode dropout (stochastic masking) not implemented.
    return y, pos_emb


if __name__ == "__main__":
    max_len = 5000

    # Case 1: module-default small shape (batch=2, time=8, d_model=32) -> path B.
    d_model = 32
    pe_table = _make_pe_table(max_len, d_model)
    key = jax.random.PRNGKey(0)
    x1 = jax.random.normal(key, (2, 8, d_model), dtype=jnp.float32)
    y1, pos1 = positional_encoding_forward(x1, pe_table, offset=0)
    y1 = jax.block_until_ready(y1)
    pos1 = jax.block_until_ready(pos1)
    ref_pos1 = pe_table[0:8][None]
    ref_y1 = x1 * math.sqrt(d_model) + ref_pos1
    assert jnp.allclose(y1, ref_y1, atol=1e-5), "case1 y mismatch"
    assert jnp.allclose(pos1, ref_pos1, atol=1e-5), "case1 pos_emb mismatch"

    # Case 2: small-batch resident-PE path (D multiple of 128) with an offset.
    d2 = 128
    pe_table2 = _make_pe_table(max_len, d2)
    x2 = jax.random.normal(jax.random.PRNGKey(0), (2, 16, d2), dtype=jnp.float32)
    off = 3
    y2, pos2 = positional_encoding_forward(x2, pe_table2, offset=off)
    y2 = jax.block_until_ready(y2)
    pos2 = jax.block_until_ready(pos2)
    ref_pos2 = pe_table2[off:off + 16][None]
    ref_y2 = x2 * math.sqrt(d2) + ref_pos2
    assert jnp.allclose(y2, ref_y2, atol=1e-4), "case2 y mismatch"
    assert jnp.allclose(pos2, ref_pos2, atol=1e-5), "case2 pos_emb mismatch"

    print("KERNEL_OK")
</pallas_src>

<mosaic_0001>
module attributes {stable_mosaic.version = 11 : i64} {
  func.func @_pe_row_kernel(%arg0: i32, %arg1: i32, %arg2: memref<2x256xf32, #tpu.memory_space<vmem>>, %arg3: memref<1x256xf32, #tpu.memory_space<vmem>>, %arg4: memref<2x256xf32, #tpu.memory_space<vmem>>) attributes {dimension_semantics = [#tpu.dimension_semantics<parallel>, #tpu.dimension_semantics<parallel>], iteration_bounds = array<i64: 1, 1>, scalar_prefetch = 0 : i64, scratch_operands = 0 : i64, tpu.core_type = #tpu.core_type<tc>, window_params = [{transform_indices = @transform_0, window_bounds = array<i64: 2, 256>}, {transform_indices = @transform_1, window_bounds = array<i64: 1, 256>}, {transform_indices = @transform_2, window_bounds = array<i64: 2, 256>}]} {
    %c0 = arith.constant 0 : index
    %c0_0 = arith.constant 0 : index
    %0 = vector.load %arg2[%c0, %c0_0] : memref<2x256xf32, #tpu.memory_space<vmem>>, vector<2x256xf32>
    %c0_1 = arith.constant 0 : index
    %c0_2 = arith.constant 0 : index
    %1 = vector.load %arg3[%c0_1, %c0_2] : memref<1x256xf32, #tpu.memory_space<vmem>>, vector<1x256xf32>
    %cst = arith.constant 5.65685415 : f32
    %2 = vector.broadcast %cst : f32 to vector<2x256xf32>
    %3 = arith.mulf %0, %2 : vector<2x256xf32>
    %4 = vector.broadcast %1 : vector<1x256xf32> to vector<2x256xf32>
    %5 = arith.addf %3, %4 : vector<2x256xf32>
    %c0_3 = arith.constant 0 : index
    %c0_4 = arith.constant 0 : index
    %6 = vector.load %arg4[%c0_3, %c0_4] : memref<2x256xf32, #tpu.memory_space<vmem>>, vector<2x256xf32>
    tpu.vector_store %arg4[%c0_3, %c0_4], %5 {strides = array<i32>} : memref<2x256xf32, #tpu.memory_space<vmem>>, vector<2x256xf32>,
    return
  }
  func.func @transform_0(%arg0: i32, %arg1: i32) -> (i32, i32) {
    %c0_i32 = arith.constant 0 : i32
    return %arg1, %arg0 : i32, i32
  }
  func.func @transform_1(%arg0: i32, %arg1: i32) -> (i32, i32) {
    %c0_i32 = arith.constant 0 : i32
    %c0_i32_0 = arith.constant 0 : i32
    return %c0_i32, %arg0 : i32, i32
  }
  func.func @transform_2(%arg0: i32, %arg1: i32) -> (i32, i32) {
    %c0_i32 = arith.constant 0 : i32
    return %arg1, %arg0 : i32, i32
  }
}

</mosaic_0001>

<llo_original>
// kernel: tpu_custom_call.1
$region0: #{tpu_custom_call.1}
  #allocation0 [shape = 'u32[]', space=smem, size = 0x4, offset = 0x4, fixed_abs, tag = 'smem constant byte address 0x4 - core index']
  #allocation1 [shape = 'u32[144,128]{1,0:T(1,128)}', space=vmem, size = 0x12000, scoped, tag = 'internal scratch']
  %s0 = inlined_call_operand.hbm [shape: f32[2,256], index: 0, kind: input, shape index: {}]
  %s1 = inlined_call_operand.hbm [shape: f32[1,256], index: 1, kind: input, shape index: {}]
  %s2 = inlined_call_operand.hbm [shape: f32[2,256], index: 2, kind: output, shape index: {}]
  %s3 = sld [smem:[#allocation0]]
  $region26: #{tpu_custom_call.1} parent=0
    _
  %s5 = ssub.s32 1, %s3
  %s6 = scalar_select 0, %s5, %s3
  $region1: #{tpu_custom_call.1} parent=0
    #allocation2 [shape = 'u8[2048]{0}', space=vmem, size = 0x800, scoped, tag = 'input window, operand 0, single buffered']
    #allocation3 [shape = 's32[1]{0}', space=sflag, size = 0x4, scoped, tag = 'scoped memory for tpu_custom_call.1']
    #allocation4 [shape = 's32[1]{0}', space=sflag, size = 0x4, scoped, tag = 'scoped memory for tpu_custom_call.1']
    #allocation5 [shape = 'u8[1024]{0}', space=vmem, size = 0x400, scoped, tag = 'input window, operand 1, single buffered']
    #allocation6 [shape = 's32[1]{0}', space=sflag, size = 0x4, scoped, tag = 'scoped memory for tpu_custom_call.1']
    #allocation7 [shape = 'u8[2048]{0}', space=vmem, size = 0x800, scoped, tag = 'output window, operand 0, single buffered']
    %7 = vsyncpa [#allocation3], 0
    %8 = vsyncpa [#allocation6], 0
    %9 = vsyncpa [#allocation4], 0
    // Predicated region
    $region2: #{tpu_custom_call.1} parent=1 // pred_check
      _
    $region3: #{tpu_custom_call.1} parent=1 // pred_check_branch
      %11 = sbr.rel (0) target = $region5
    $region4: #{tpu_custom_call.1} parent=1 // pred_region
      %s13 = ssub.s32 64, 64
      %14 = vsyncadd [#allocation3], %s13
      %s16 = sshll.u32 [#allocation2], 4
      %s17 = int_to_ptr.vmem [resolvable:$true] %s16
      %19 = dma.hbm_to_vmem [thread:$0]  %s0, 64, %s17, [#allocation3]
    $region5: #{tpu_custom_call.1} parent=1 // pred_fallthru
      _
    // Predicated region
    $region6: #{tpu_custom_call.1} parent=1 // pred_check
      _
    $region7: #{tpu_custom_call.1} parent=1 // pred_check_branch
      %21 = sbr.rel (0) target = $region9
    $region8: #{tpu_custom_call.1} parent=1 // pred_region
      %s23 = ssub.s32 32, 32
      %24 = vsyncadd [#allocation6], %s23
      %s26 = sshll.u32 [#allocation5], 4
      %s27 = int_to_ptr.vmem [resolvable:$true] %s26
      %29 = dma.hbm_to_vmem [thread:$0]  %s1, 32, %s27, [#allocation6]
    $region9: #{tpu_custom_call.1} parent=1 // pred_fallthru
      _
    // Predicated region
    $region10: #{tpu_custom_call.1} parent=1 // pred_check
      _
    $region11: #{tpu_custom_call.1} parent=1 // pred_check_branch
      %31 = sbr.rel (0) target = $region13
    $region12: #{tpu_custom_call.1} parent=1 // pred_region
      %32 = dma.done [#allocation3], 64
    $region13: #{tpu_custom_call.1} parent=1 // pred_fallthru
      _
    // Predicated region
    $region14: #{tpu_custom_call.1} parent=1 // pred_check
      _
    $region15: #{tpu_custom_call.1} parent=1 // pred_check_branch
      %34 = sbr.rel (0) target = $region17
    $region16: #{tpu_custom_call.1} parent=1 // pred_region
      %35 = dma.done [#allocation6], 32
    $region17: #{tpu_custom_call.1} parent=1 // pred_fallthru
      _
    %v36 = vld [vmem:[#allocation2] sm:$0xf]
    %v37 = vld [vmem:[#allocation5] sm:$0x3]
    %v38 = vmul.f32 %v36, 5.656854
    %v40 = vlaneseq
    %v41 = vshrl.u32 %v40, 7
    %v42 = vsub.s32 0, %v41
    %v43 = vrot.slane %v37, %v42
    %v44 = vlaneseq
    %v45 = vshrl.u32 %v44, 7
    %v46 = vsub.s32 1, %v45
    %v47 = vrot.slane %v37, %v46
    %v48 = vcombine.low %v43, %v47
    %v50 = vunpack.c.l.s4 1983009808
    %v51 = vunpack.c.0.s8 %v50
    %v52 = vlaneseq
    %v53 = vshrl.u32 %v52, 7
    %v54 = vsub.s32 %v51, %v53
    %v55 = vrot.slane %v48, %v54
    %v57 = vadd.f32 %v38, %v55
    %58 = vst [vmem:[#allocation7] sm:$0xf] %v57
    // Predicated region
    $region18: #{tpu_custom_call.1} parent=1 // pred_check
      _
    $region19: #{tpu_custom_call.1} parent=1 // pred_check_branch
      %60 = sbr.rel (0) target = $region21
    $region20: #{tpu_custom_call.1} parent=1 // pred_region
      %s62 = ssub.s32 64, 64
      %63 = vsyncadd [#allocation4], %s62
      %s65 = sshll.u32 [#allocation7], 4
      %s66 = int_to_ptr.vmem [resolvable:$true] %s65
      %68 = dma.vmem_to_hbm [thread:$0]  %s66, 64, %s2, [#allocation4]
    $region21: #{tpu_custom_call.1} parent=1 // pred_fallthru
      _
    // Predicated region
    $region22: #{tpu_custom_call.1} parent=1 // pred_check
      _
    $region23: #{tpu_custom_call.1} parent=1 // pred_check_branch
      %70 = sbr.rel (0) target = $region25
    $region24: #{tpu_custom_call.1} parent=1 // pred_region
      %71 = dma.done [#allocation4], 64
    $region25: #{tpu_custom_call.1} parent=1 // pred_fallthru
      _
    %72 = vsyncpa [#allocation3], 1
    %73 = vsyncpa [#allocation6], 1
    %74 = vsyncpa [#allocation4], 1

</llo_original>
